<compile_context>
chip_gen: v6e
topology: v6e:2x2x1
jax: 0.10.0
libtpu: 0.0.40
codegen_flags: <defaults>
</compile_context>

<pallas_src>
import math
from functools import partial

import jax
import jax.numpy as jnp
from jax.experimental import pallas as pl
from jax.experimental.pallas import tpu as pltpu

F32 = jnp.float32
BF16 = jnp.bfloat16
BN_EPS = 1e-3            # tf_efficientnet BatchNorm eps
WIDTH_MULT = 1.4         # EfficientNet-B4 width multiplier
DEPTH_MULT = 1.8         # EfficientNet-B4 depth multiplier
SE_RATIO = 0.25

# EfficientNet-B0 base stages: (expand_ratio, kernel, stride, channels, repeats)
_B0_STAGES = [
    (1, 3, 1, 16, 1),
    (6, 3, 2, 24, 2),
    (6, 5, 2, 40, 2),
    (6, 3, 2, 80, 3),
    (6, 5, 1, 112, 3),
    (6, 5, 2, 192, 4),
    (6, 3, 1, 320, 1),
]


# ---------------------- generation-aware VMEM sizing ------------------------

def _vmem_config():
    """(row budget, scoped vmem limit) sized from the actual VMEM capacity."""
    try:
        cap = int(pltpu.get_tpu_info().vmem_capacity_bytes)
    except Exception:
        cap = 64 << 20                                   # conservative default
    limit = min(96 << 20, max(cap - (16 << 20), 32 << 20))
    budget = max(min(28 << 20, limit // 4), 6 << 20)
    return budget, limit


_ROW_BUDGET, _VMEM_LIMIT = _vmem_config()


def _compiler_params(semantics):
    return pltpu.CompilerParams(dimension_semantics=semantics,
                                vmem_limit_bytes=_VMEM_LIMIT)


_BUFFERED1 = None  # resolved lazily by _const_kw()


def _probe_buffered1():
    # pl.Buffered(1) (single-buffered, constant-index blocks) may not be
    # accepted by every jax version; probe with a tiny kernel once.
    try:
        def _k(x_ref, o_ref):
            o_ref[...] = x_ref[...] + 1.0

        f = pl.pallas_call(
            _k,
            out_shape=jax.ShapeDtypeStruct((16, 128), jnp.float32),
            grid=(2,),
            in_specs=[pl.BlockSpec((8, 128), lambda i: (0, 0),
                                   pipeline_mode=pl.Buffered(1))],
            out_specs=pl.BlockSpec((8, 128), lambda i: (i, 0)),
        )
        jax.block_until_ready(f(jnp.zeros((8, 128), jnp.float32)))
        return True
    except Exception:
        return False


def _const_kw():
    """Extra BlockSpec kwargs for blocks whose index never changes."""
    global _BUFFERED1
    if _BUFFERED1 is None:
        _BUFFERED1 = _probe_buffered1()
    return {'pipeline_mode': pl.Buffered(1)} if _BUFFERED1 else {}


def _pick_tm(m, per_row_bytes, fixed_bytes=0):
    """Largest hardware-friendly row tile fitting the VMEM budget; forces >=2
    grid steps (megacore) when the row extent is large enough."""
    avail = max(_ROW_BUDGET - fixed_bytes, 0)
    tm = min(avail // max(per_row_bytes, 1), 1024)
    if tm >= m:
        if m >= 256:                                # keep both cores busy
            half = -(-m // 2)
            half = -(-half // 128) * 128
            return half if half < m else m
        return m
    if tm >= 256:
        tm = (tm // 256) * 256
    elif tm >= 128:
        tm = 128
    elif tm >= 16:
        tm = (tm // 16) * 16
    else:
        tm = 16
    return min(tm, m)


# ------------------------------ Pallas kernels ------------------------------

def _mm_bn_kernel(x_ref, w_ref, s_ref, b_ref, o_ref, *, act):
    # fused (im2col / 1x1) conv -> folded BatchNorm -> optional SiLU
    y = jnp.dot(x_ref[...], w_ref[...], preferred_element_type=jnp.float32)
    y = y * s_ref[...] + b_ref[...]
    if act:
        y = y * jax.nn.sigmoid(y)          # SiLU / swish
    o_ref[...] = y.astype(o_ref.dtype)


def _proj_se_kernel(x_ref, g_ref, w_ref, s_ref, b_ref, o_ref):
    # SE rescale (bf16 gate) -> project 1x1 conv -> BN (no activation)
    y = jnp.dot(x_ref[...] * g_ref[...], w_ref[...],
                preferred_element_type=jnp.float32)
    y = y * s_ref[...] + b_ref[...]
    o_ref[...] = y.astype(o_ref.dtype)


def _proj_se_res_kernel(x_ref, g_ref, w_ref, s_ref, b_ref, r_ref, o_ref):
    # SE rescale -> project conv -> BN -> residual add
    y = jnp.dot(x_ref[...] * g_ref[...], w_ref[...],
                preferred_element_type=jnp.float32)
    y = y * s_ref[...] + b_ref[...]
    o_ref[...] = (y + r_ref[...].astype(jnp.float32)).astype(o_ref.dtype)


def _dw_se_kernel(x_ref, w_ref, s_ref, b_ref, o_ref, sum_ref, *,
                  k, stride, ho, wo):
    # Depthwise conv over a (phased, TF-SAME padded) image slab resident in
    # VMEM: taps are static slices of the slab (no k^2 HBM materialization).
    # Fused: folded BN -> SiLU -> store, plus SE global-average-pool sums.
    c = o_ref.shape[-1]
    acc = jnp.zeros((ho, wo, c), jnp.float32)
    for kh in range(k):
        for kw in range(k):
            phase = (kh % stride) * stride + (kw % stride)
            r0, c0 = kh // stride, kw // stride
            tap = x_ref[phase, r0:r0 + ho, c0:c0 + wo, :].astype(jnp.float32)
            acc = acc + tap * w_ref[kh * k + kw, :]
    y = acc * s_ref[0, :] + b_ref[0, :]
    y = y * jax.nn.sigmoid(y)
    o_ref[...] = y.astype(o_ref.dtype)
    # full spatial extent per grid step -> no padded rows pollute the sums
    sum_ref[...] = jnp.sum(y, axis=(0, 1))[None, :]


def _dw_taps_kernel(x_ref, w_ref, s_ref, b_ref, o_ref, *, taps):
    # fallback: per-tap MAC over an HBM-materialized (k*k, M, C) tap tensor
    tm, c = o_ref.shape

    def body(t, a):
        return a + x_ref[t].astype(jnp.float32) * w_ref[t]

    acc = jax.lax.fori_loop(0, taps, body, jnp.zeros((tm, c), jnp.float32),
                            unroll=True)
    y = acc * s_ref[...] + b_ref[...]
    y = y * jax.nn.sigmoid(y)
    o_ref[...] = y.astype(o_ref.dtype)


# ------------------------------ kernel wrappers ------------------------------

def matmul_bn(x2d, w, scale, bias, act):
    # x2d: (M, K) bf16, w: (K, Cout) bf16, scale/bias: (1, Cout) f32
    m, kdim = x2d.shape
    cout = w.shape[1]
    # split wide outputs so even a single-row-tile layer has >=2 parallel
    # grid steps (megacore) and a smaller resident weight block
    tn = cout // 2 if (cout >= 1024 and cout % 256 == 0) else cout
    ckw = _const_kw() if tn == cout else {}
    wbuf = 1 if ckw else 2
    fixed = wbuf * 2 * tn * (kdim + 4)                 # weight + scale/bias
    per_row = 4 * kdim + 8 * tn                        # 2x bf16 in/out + f32
    tm = _pick_tm(m, per_row, fixed)
    grid = (pl.cdiv(m, tm), cout // tn)
    return pl.pallas_call(
        partial(_mm_bn_kernel, act=act),
        out_shape=jax.ShapeDtypeStruct((m, cout), BF16),
        grid=grid,
        in_specs=[
            pl.BlockSpec((tm, kdim), lambda i, j: (i, 0)),
            pl.BlockSpec((kdim, tn), lambda i, j: (0, j), **ckw),
            pl.BlockSpec((1, tn), lambda i, j: (0, j), **ckw),
            pl.BlockSpec((1, tn), lambda i, j: (0, j), **ckw),
        ],
        out_specs=pl.BlockSpec((tm, tn), lambda i, j: (i, j)),
        compiler_params=_compiler_params(("parallel", "parallel")),
    )(x2d, w, scale, bias)


def project_se_bn(x3, gate, w, scale, bias, residual=None):
    # x3: (N, HW, Cmid) bf16, gate: (N, 1, Cmid) bf16,
    # residual: (N, HW, Cout) bf16 or None
    n, hw, cmid = x3.shape
    cout = w.shape[1]
    ckw = _const_kw()
    wbuf = 1 if ckw else 2
    fixed = wbuf * 2 * cout * (cmid + 4) + 4 * cmid
    per_row = 4 * cmid + 8 * cout + (4 * cout if residual is not None else 0)
    tm = _pick_tm(hw, per_row, fixed)
    grid = (n, pl.cdiv(hw, tm))

    # TODO(synk): Cout in {24,32,56} leaves <128-lane masked stores; a
    # lane-dense packed output layout would need the consumer fused as well.
    x_spec = pl.BlockSpec((None, tm, cmid), lambda b, i: (b, i, 0))
    g_spec = pl.BlockSpec((None, 1, cmid), lambda b, i: (b, 0, 0))
    w_spec = pl.BlockSpec((cmid, cout), lambda b, i: (0, 0), **ckw)
    v_spec = pl.BlockSpec((1, cout), lambda b, i: (0, 0), **ckw)
    o_spec = pl.BlockSpec((None, tm, cout), lambda b, i: (b, i, 0))
    cparams = _compiler_params(("parallel", "parallel"))

    if residual is None:
        return pl.pallas_call(
            _proj_se_kernel,
            out_shape=jax.ShapeDtypeStruct((n, hw, cout), BF16),
            grid=grid,
            in_specs=[x_spec, g_spec, w_spec, v_spec, v_spec],
            out_specs=o_spec,
            compiler_params=cparams,
        )(x3, gate, w, scale, bias)

    r_spec = pl.BlockSpec((None, tm, cout), lambda b, i: (b, i, 0))
    return pl.pallas_call(
        _proj_se_res_kernel,
        out_shape=jax.ShapeDtypeStruct((n, hw, cout), BF16),
        grid=grid,
        in_specs=[x_spec, g_spec, w_spec, v_spec, v_spec, r_spec],
        out_specs=o_spec,
        compiler_params=cparams,
    )(x3, gate, w, scale, bias, residual)


# ------------------------------ depthwise conv -------------------------------

def _same_pads(size, k, s):
    # TF "SAME" padding (Conv2dSame in tf_efficientnet)
    out = -(-size // s)
    pad = max((out - 1) * s + k - size, 0)
    return pad // 2, pad - pad // 2


def _gather_taps(x, k, stride):
    # fallback path only: (k*k, N*Ho*Wo, C) HBM tap tensor
    n, h, w, c = x.shape
    pad_h = _same_pads(h, k, stride)
    pad_w = _same_pads(w, k, stride)
    xp = jnp.pad(x, ((0, 0), pad_h, pad_w, (0, 0)))
    ho = -(-h // stride)
    wo = -(-w // stride)
    taps = [xp[:, kh:kh + (ho - 1) * stride + 1:stride,
               kw:kw + (wo - 1) * stride + 1:stride, :]
            for kh in range(k) for kw in range(k)]
    return jnp.stack(taps, axis=0).reshape(k * k, n * ho * wo, c), (n, ho, wo)


def _dw_fallback(x, p, k, stride):
    # TODO(synk): replace with halo-row spatial tiling (manual make_async_copy)
    # so very large spatial layers also avoid the k^2 tap materialization.
    taps, (n, ho, wo) = _gather_taps(x, k, stride)
    kk, m, c = taps.shape
    ckw = _const_kw()
    per_row = 4 * kk * c + 8 * c + 4 * c
    tm = _pick_tm(m, per_row, 0)
    y = pl.pallas_call(
        partial(_dw_taps_kernel, taps=kk),
        out_shape=jax.ShapeDtypeStruct((m, c), BF16),
        grid=(pl.cdiv(m, tm),),
        in_specs=[
            pl.BlockSpec((kk, tm, c), lambda i: (0, i, 0)),
            pl.BlockSpec((kk, c), lambda i: (0, 0), **ckw),
            pl.BlockSpec((1, c), lambda i: (0, 0), **ckw),
            pl.BlockSpec((1, c), lambda i: (0, 0), **ckw),
        ],
        out_specs=pl.BlockSpec((tm, c), lambda i: (i, 0)),
        compiler_params=_compiler_params(("parallel",)),
    )(taps, p['w'], p['scale'], p['bias'])
    pooled = jnp.mean(y.reshape(n, ho * wo, c).astype(F32), axis=1)
    return y.reshape(n, ho, wo, c), pooled


def dw_conv_se_bn_act(x, p, k, stride):
    """Depthwise conv + folded BN + SiLU, returns (activation, SE pooled mean)."""
    n, h, w, c = x.shape
    ho, wo = -(-h // stride), -(-w // stride)
    nph = stride * stride
    hh = h + k - 1 if stride == 1 else ho + (k - 1) // stride
    wh = w + k - 1 if stride == 1 else wo + (k - 1) // stride

    # whole-image VMEM footprint estimate (2x-buffered in/out + f32 temps)
    est = 2 * nph * hh * wh * c * 2 + 2 * ho * wo * c * 2 + 3 * ho * wo * c * 4
    if est > _VMEM_LIMIT // 2:
        return _dw_fallback(x, p, k, stride)

    pad_h = _same_pads(h, k, stride)
    pad_w = _same_pads(w, k, stride)
    if stride == 1:
        xph = jnp.pad(x, ((0, 0), pad_h, pad_w, (0, 0)))        # (N, Hp, Wp, C)
    else:
        # space-to-depth phases: every tap of a stride-2 conv becomes a
        # contiguous static slice of one of the 4 phase planes.
        xp = jnp.pad(x, ((0, 0),
                         (pad_h[0], stride * hh - h - pad_h[0]),
                         (pad_w[0], stride * wh - w - pad_w[0]),
                         (0, 0)))
        xp = xp.reshape(n, hh, stride, wh, stride, c)
        xph = jnp.transpose(xp, (0, 2, 4, 1, 3, 5)).reshape(n * nph, hh, wh, c)

    ckw = _const_kw()
    y, ssum = pl.pallas_call(
        partial(_dw_se_kernel, k=k, stride=stride, ho=ho, wo=wo),
        out_shape=(jax.ShapeDtypeStruct((n, ho, wo, c), BF16),
                   jax.ShapeDtypeStruct((n, 1, c), F32)),
        grid=(n,),
        in_specs=[
            pl.BlockSpec((nph, hh, wh, c), lambda b: (b, 0, 0, 0)),
            pl.BlockSpec((k * k, c), lambda b: (0, 0), **ckw),
            pl.BlockSpec((1, c), lambda b: (0, 0), **ckw),
            pl.BlockSpec((1, c), lambda b: (0, 0), **ckw),
        ],
        out_specs=(
            pl.BlockSpec((None, ho, wo, c), lambda b: (b, 0, 0, 0)),
            pl.BlockSpec((None, 1, c), lambda b: (b, 0, 0)),
        ),
        compiler_params=_compiler_params(("parallel",)),
    )(xph, p['w'], p['scale'], p['bias'])
    pooled = ssum[:, 0, :] * (1.0 / (ho * wo))                  # (N, C) f32
    return y, pooled


# ------------------------------ JAX glue -----------------------------------

def _im2col(x, k, stride):
    # taps gathered directly in (kh, kw, cin)-major channel order: a single
    # (N, Ho, Wo, k*k*Cin) materialization, no extra transpose round trip.
    n, h, w, c = x.shape
    pad_h = _same_pads(h, k, stride)
    pad_w = _same_pads(w, k, stride)
    xp = jnp.pad(x, ((0, 0), pad_h, pad_w, (0, 0)))
    ho = -(-h // stride)
    wo = -(-w // stride)
    cols = [xp[:, kh:kh + (ho - 1) * stride + 1:stride,
               kw:kw + (wo - 1) * stride + 1:stride, :]
            for kh in range(k) for kw in range(k)]
    patches = jnp.concatenate(cols, axis=-1)
    return patches.reshape(n * ho * wo, k * k * c), (n, ho, wo)


def stem_conv_bn_act(x, p, k, stride):
    cols, (n, ho, wo) = _im2col(x, k, stride)
    y = matmul_bn(cols, p['w'], p['scale'], p['bias'], act=True)
    return y.reshape(n, ho, wo, -1)


def pw_conv_bn_act(x, p, act):
    n, h, w, c = x.shape
    y = matmul_bn(x.reshape(n * h * w, c), p['w'], p['scale'], p['bias'], act)
    return y.reshape(n, h, w, -1)


def se_gate(pooled, p):
    # tiny SE FCs stay in plain JAX (few KFLOPs); the pooling is fused into
    # the depthwise kernel and the rescale into the projection kernel.
    z = pooled @ p['w1'] + p['b1']
    z = z * jax.nn.sigmoid(z)                          # SiLU
    g = jax.nn.sigmoid(z @ p['w2'] + p['b2'])          # (N, Cmid)
    return g[:, None, :].astype(BF16)                  # (N, 1, Cmid) bf16


# ------------------------------ parameters ---------------------------------

class _KeyGen:
    def __init__(self, key):
        self.key = key
        self.i = 0

    def __call__(self):
        self.i += 1
        return jax.random.fold_in(self.key, self.i)


def _bn_params(kg, c):
    gamma = 1.0 + 0.05 * jax.random.normal(kg(), (c,), F32)
    beta = 0.05 * jax.random.normal(kg(), (c,), F32)
    mean = 0.05 * jax.random.normal(kg(), (c,), F32)
    var = 1.0 + 0.05 * jnp.abs(jax.random.normal(kg(), (c,), F32))
    scale = gamma * jax.lax.rsqrt(var + BN_EPS)
    bias = beta - mean * scale
    return scale.reshape(1, c), bias.reshape(1, c)


def _conv_bn_params(kg, cin, cout, k):
    fan_in = cin * k * k
    w = (jax.random.normal(kg(), (k * k * cin, cout), F32)
         / math.sqrt(fan_in)).astype(BF16)
    scale, bias = _bn_params(kg, cout)
    return {'w': w, 'scale': scale, 'bias': bias}


def _dw_bn_params(kg, c, k):
    w = jax.random.normal(kg(), (k * k, c), F32) / math.sqrt(k * k)
    scale, bias = _bn_params(kg, c)
    return {'w': w, 'scale': scale, 'bias': bias}


def _se_params(kg, c, c_red):
    w1 = jax.random.normal(kg(), (c, c_red), F32) / math.sqrt(c)
    b1 = jnp.zeros((1, c_red), F32)
    w2 = jax.random.normal(kg(), (c_red, c), F32) / math.sqrt(c_red)
    b2 = jnp.zeros((1, c), F32)
    return {'w1': w1, 'b1': b1, 'w2': w2, 'b2': b2}


def _round_channels(c, mult=WIDTH_MULT, divisor=8):
    c *= mult
    new_c = max(divisor, int(c + divisor / 2) // divisor * divisor)
    if new_c < 0.9 * c:
        new_c += divisor
    return int(new_c)


def _round_repeats(r, mult=DEPTH_MULT):
    return int(math.ceil(mult * r))


def build_params(key):
    kg = _KeyGen(key)
    params = {}
    stem_c = _round_channels(32)                       # 48
    params['stem'] = _conv_bn_params(kg, 3, stem_c, 3)
    blocks = []
    cin = stem_c
    for expand, k, stride, base_c, base_r in _B0_STAGES:
        cout = _round_channels(base_c)
        repeats = _round_repeats(base_r)
        for bi in range(repeats):
            s = stride if bi == 0 else 1
            mid = cin * expand
            se_red = max(1, int(cin * SE_RATIO))
            blocks.append({
                'k': k, 'stride': s,
                'has_residual': (s == 1 and cin == cout),
                'expand': None if expand == 1 else _conv_bn_params(kg, cin, mid, 1),
                'dw': _dw_bn_params(kg, mid, k),
                'se': _se_params(kg, mid, se_red),
                'project': _conv_bn_params(kg, mid, cout, 1),
            })
            cin = cout
    params['blocks'] = blocks
    params['head'] = _conv_bn_params(kg, cin, _round_channels(1280), 1)  # 448->1792
    return params


# ------------------------------ forward ------------------------------------

def forward_features(params, x_nchw):
    # timm EfficientNet.forward_features:
    #   conv_stem -> bn1(+SiLU) -> blocks -> conv_head -> bn2(+SiLU)
    # TODO(synk): drop_path / dropout are identity at inference and omitted.
    # TODO(synk): fusing expand 1x1 + depthwise into one spatially tiled call
    #             would keep the 6x-wide mid tensor VMEM-resident end to end.
    x = jnp.transpose(x_nchw, (0, 2, 3, 1)).astype(BF16)       # NCHW -> NHWC bf16
    x = stem_conv_bn_act(x, params['stem'], k=3, stride=2)
    for p in params['blocks']:
        shortcut = x
        h = x
        if p['expand'] is not None:                            # expand 1x1
            h = pw_conv_bn_act(h, p['expand'], act=True)
        h, pooled = dw_conv_se_bn_act(h, p['dw'], k=p['k'], stride=p['stride'])
        gate = se_gate(pooled, p['se'])                        # (N, 1, Cmid) bf16
        n, hh, ww, cm = h.shape
        h3 = h.reshape(n, hh * ww, cm)
        cout = p['project']['w'].shape[1]
        res = shortcut.reshape(n, hh * ww, cout) if p['has_residual'] else None
        y = project_se_bn(h3, gate, p['project']['w'], p['project']['scale'],
                          p['project']['bias'], residual=res)
        x = y.reshape(n, hh, ww, cout)
    x = pw_conv_bn_act(x, params['head'], act=True)
    return jnp.transpose(x, (0, 3, 1, 2)).astype(F32)          # NHWC -> NCHW f32


if __name__ == "__main__":
    key = jax.random.PRNGKey(0)
    params = build_params(key)
    # small NCHW image input consistent with the module (3 channels)
    x = jax.random.normal(jax.random.fold_in(key, 12345), (2, 3, 32, 32), F32)
    out = forward_features(params, x)
    out = jax.block_until_ready(out)
    assert out.shape == (2, 1792, 1, 1), out.shape
    assert bool(jnp.all(jnp.isfinite(out)))
    print("KERNEL_OK")
</pallas_src>

<mosaic_0001>
module attributes {stable_mosaic.version = 11 : i64} {
  func.func @_k(%arg0: i32, %arg1: memref<8x128xf32, #tpu.memory_space<vmem>>, %arg2: memref<8x128xf32, #tpu.memory_space<vmem>>) attributes {dimension_semantics = [#tpu.dimension_semantics<arbitrary>], iteration_bounds = array<i64: 2>, scalar_prefetch = 0 : i64, scratch_operands = 0 : i64, tpu.core_type = #tpu.core_type<tc>, window_params = [{pipeline_mode = #tpu.pipeline_mode<synchronous>, transform_indices = @transform_0, window_bounds = array<i64: 8, 128>}, {transform_indices = @transform_1, window_bounds = array<i64: 8, 128>}]} {
    %c0 = arith.constant 0 : index
    %c0_0 = arith.constant 0 : index
    %0 = vector.load %arg1[%c0, %c0_0] : memref<8x128xf32, #tpu.memory_space<vmem>>, vector<8x128xf32>
    %cst = arith.constant 1.000000e+00 : f32
    %1 = vector.broadcast %cst : f32 to vector<8x128xf32>
    %2 = arith.addf %0, %1 : vector<8x128xf32>
    %c0_1 = arith.constant 0 : index
    %c0_2 = arith.constant 0 : index
    %3 = vector.load %arg2[%c0_1, %c0_2] : memref<8x128xf32, #tpu.memory_space<vmem>>, vector<8x128xf32>
    tpu.vector_store %arg2[%c0_1, %c0_2], %2 {strides = array<i32>} : memref<8x128xf32, #tpu.memory_space<vmem>>, vector<8x128xf32>,
    return
  }
  func.func @transform_0(%arg0: i32) -> (i32, i32) {
    %c0_i32 = arith.constant 0 : i32
    %c0_i32_0 = arith.constant 0 : i32
    %c0_i32_1 = arith.constant 0 : i32
    return %c0_i32, %c0_i32_0 : i32, i32
  }
  func.func @transform_1(%arg0: i32) -> (i32, i32) {
    %c0_i32 = arith.constant 0 : i32
    %c0_i32_0 = arith.constant 0 : i32
    return %arg0, %c0_i32 : i32, i32
  }
}

module attributes {stable_mosaic.version = 11 : i64} {
  func.func @_mm_bn_kernel(%arg0: i32, %arg1: i32, %arg2: memref<256x27xbf16, #tpu.memory_space<vmem>>, %arg3: memref<27x48xbf16, #tpu.memory_space<vmem>>, %arg4: memref<1x48xf32, #tpu.memory_space<vmem>>, %arg5: memref<1x48xf32, #tpu.memory_space<vmem>>, %arg6: memref<256x48xbf16, #tpu.memory_space<vmem>>) attributes {dimension_semantics = [#tpu.dimension_semantics<parallel>, #tpu.dimension_semantics<parallel>], iteration_bounds = array<i64: 2, 1>, scalar_prefetch = 0 : i64, scratch_operands = 0 : i64, tpu.core_type = #tpu.core_type<tc>, window_params = [{transform_indices = @transform_0, window_bounds = array<i64: 256, 27>}, {transform_indices = @transform_1, window_bounds = array<i64: 27, 48>}, {transform_indices = @transform_2, window_bounds = array<i64: 1, 48>}, {transform_indices = @transform_3, window_bounds = array<i64: 1, 48>}, {transform_indices = @transform_4, window_bounds = array<i64: 256, 48>}]} {
    %c0 = arith.constant 0 : index
    %c0_0 = arith.constant 0 : index
    %0 = vector.load %arg2[%c0, %c0_0] : memref<256x27xbf16, #tpu.memory_space<vmem>>, vector<256x27xbf16>
    %c0_1 = arith.constant 0 : index
    %c0_2 = arith.constant 0 : index
    %1 = vector.load %arg3[%c0_1, %c0_2] : memref<27x48xbf16, #tpu.memory_space<vmem>>, vector<27x48xbf16>
    %cst = arith.constant dense<0.000000e+00> : vector<256x48xf32>
    %2 = tpu.matmul %0, %1, %cst {dimension_numbers = #tpu.dot_dimension_numbers<[1], [0], [0], [1], [0, 0, 1, 1], [], []>} : vector<256x27xbf16>, vector<27x48xbf16>, vector<256x48xf32> -> vector<256x48xf32>
    %c0_3 = arith.constant 0 : index
    %c0_4 = arith.constant 0 : index
    %3 = vector.load %arg4[%c0_3, %c0_4] : memref<1x48xf32, #tpu.memory_space<vmem>>, vector<1x48xf32>
    %4 = vector.broadcast %3 : vector<1x48xf32> to vector<256x48xf32>
    %5 = arith.mulf %2, %4 : vector<256x48xf32>
    %c0_5 = arith.constant 0 : index
    %c0_6 = arith.constant 0 : index
    %6 = vector.load %arg5[%c0_5, %c0_6] : memref<1x48xf32, #tpu.memory_space<vmem>>, vector<1x48xf32>
    %7 = vector.broadcast %6 : vector<1x48xf32> to vector<256x48xf32>
    %8 = arith.addf %5, %7 : vector<256x48xf32>
    %9 = arith.negf %8 : vector<256x48xf32>
    %10 = math.exp %9 : vector<256x48xf32>
    %cst_7 = arith.constant 1.000000e+00 : f32
    %11 = vector.broadcast %cst_7 : f32 to vector<256x48xf32>
    %12 = arith.addf %11, %10 : vector<256x48xf32>
    %13 = arith.divf %11, %12 : vector<256x48xf32>
    %14 = arith.mulf %8, %13 : vector<256x48xf32>
    %15 = arith.truncf %14 : vector<256x48xf32> to vector<256x48xbf16>
    %c0_8 = arith.constant 0 : index
    %c0_9 = arith.constant 0 : index
    %16 = vector.load %arg6[%c0_8, %c0_9] : memref<256x48xbf16, #tpu.memory_space<vmem>>, vector<256x48xbf16>
    tpu.vector_store %arg6[%c0_8, %c0_9], %15 {strides = array<i32>} : memref<256x48xbf16, #tpu.memory_space<vmem>>, vector<256x48xbf16>,
    return
  }
  func.func @transform_0(%arg0: i32, %arg1: i32) -> (i32, i32) {
    %c0_i32 = arith.constant 0 : i32
    %c0_i32_0 = arith.constant 0 : i32
    return %arg0, %c0_i32 : i32, i32
  }
  func.func @transform_1(%arg0: i32, %arg1: i32) -> (i32, i32) {
    %c0_i32 = arith.constant 0 : i32
    %c0_i32_0 = arith.constant 0 : i32
    return %c0_i32, %arg1 : i32, i32
  }
  func.func @transform_2(%arg0: i32, %arg1: i32) -> (i32, i32) {
    %c0_i32 = arith.constant 0 : i32
    %c0_i32_0 = arith.constant 0 : i32
    return %c0_i32, %arg1 : i32, i32
  }
  func.func @transform_3(%arg0: i32, %arg1: i32) -> (i32, i32) {
    %c0_i32 = arith.constant 0 : i32
    %c0_i32_0 = arith.constant 0 : i32
    return %c0_i32, %arg1 : i32, i32
  }
  func.func @transform_4(%arg0: i32, %arg1: i32) -> (i32, i32) {
    %c0_i32 = arith.constant 0 : i32
    return %arg0, %arg1 : i32, i32
  }
}

</mosaic_0001>

<llo_original>
// kernel: tpu_custom_call.1
$region0: #{tpu_custom_call.1}
  #allocation0 [shape = 'u32[]', space=smem, size = 0x4, offset = 0x4, fixed_abs, tag = 'smem constant byte address 0x4 - core index']
  #allocation1 [shape = 'u32[144,128]{1,0:T(1,128)}', space=vmem, size = 0x12000, scoped, tag = 'internal scratch']
  %s0 = inlined_call_operand.hbm [shape: f32[8,128], index: 0, kind: input, shape index: {}]
  %s1 = inlined_call_operand.hbm [shape: f32[16,128], index: 1, kind: output, shape index: {}]
  %s2 = sld [smem:[#allocation0]]
  $region41: #{tpu_custom_call.1} parent=0
    _
  %s4 = ssub.s32 1, %s2
  %s5 = scalar_select 0, %s4, %s2
  $region1: #{tpu_custom_call.1} parent=0
    #allocation2 [shape = 'u8[4096]{0}', space=vmem, size = 0x1000, scoped, tag = 'input window, operand 0, single buffered']
    #allocation3 [shape = 's32[2]{0}', space=sflag, size = 0x8, scoped, tag = 'scoped memory for tpu_custom_call.1']
    #allocation4 [shape = 's32[2]{0}', space=sflag, size = 0x8, scoped, tag = 'scoped memory for tpu_custom_call.1']
    #allocation5 [shape = 'u8[8192]{0}', space=vmem, size = 0x2000, scoped, tag = 'output window, operand 0']
    %6 = vsyncpa [#allocation3], 0
    %7 = vsyncpa [#allocation4], 0
    %s8 = scalar_lea.sflag [#allocation4], 1
    %9 = vsyncpa %s8, 0
    loop: start=0, step=1, limit=4
    $region2: #{tpu_custom_call.1} parent=1 // loop_pre_header
      _
    $region3: #{tpu_custom_call.1} parent=1 // loop_header
      %s11 = sphi 0, %s15
      %p12 = scmp.ge.s32.totalorder %s11, 4
      %s19 = sphi 0, %s19
      %s21 = sphi 0, %s19
      %s22 = sphi 0, %s21
      %s36 = sphi 0, %s22
      %s42 = sphi 0, %s44
      %s45 = sphi 0, %s42
      %s46 = sphi 0, %s45
      %s62 = sphi 0, %s46
    $region4: #{tpu_custom_call.1} parent=1 // loop_header_branch
      %14 = sbr.rel (%p12) target = $region8
    $region5: #{tpu_custom_call.1} parent=1 // loop_body
      %s16 = ssub.s32 %s11, 1
      %s17 = ssub.s32 %s11, 2
      %s18 = sadd.s32 %s11, 1
      %s20 = sadd.s32 %s19, 1
      %p23 = scmp.eq.s32.totalorder %s11, 1
      %p24 = scmp.ne.s32.totalorder %s19, %s21
      %p25 = scmp.eq.s32.totalorder %s11, 0
      %p26 = por %p24, %p25
      %p27 = scmp.ne.s32.totalorder %s19, %s21
      %p28 = scmp.eq.s32.totalorder %s16, 1
      %p29 = por %p27, %p28
      %p30 = scmp.ne.s32.totalorder %s21, %s22
      %p31 = scmp.eq.s32.totalorder %s16, 0
      %p32 = por %p30, %p31
      %p33 = scmp.ne.s32.totalorder %s21, %s22
      %p34 = scmp.eq.s32.totalorder %s17, 1
      %p35 = por %p33, %p34
      %p37 = scmp.ne.s32.totalorder %s22, %s36
      %p38 = scmp.eq.s32.totalorder %s17, 0
      %p39 = por %p37, %p38
      %s40 = ssub.s32 %s11, %s18
      %p41 = scmp.eq.s32.totalorder %s40, 0
      %s43 = sadd.s32 %s42, 1
      %s44 = scalar_select %p41, %s42, %s43
      %p47 = pneg %p41
      %p48 = scmp.eq.s32.totalorder %s11, 1
      %p49 = por %p47, %p48
      %p50 = scmp.ne.s32.totalorder %s42, %s45
      %p51 = scmp.eq.s32.totalorder %s11, 0
      %p52 = por %p50, %p51
      %p53 = scmp.ne.s32.totalorder %s42, %s45
      %p54 = scmp.eq.s32.totalorder %s16, 1
      %p55 = por %p53, %p54
      %p56 = scmp.ne.s32.totalorder %s45, %s46
      %p57 = scmp.eq.s32.totalorder %s16, 0
      %p58 = por %p56, %p57
      %p59 = scmp.ne.s32.totalorder %s45, %s46
      %p60 = scmp.eq.s32.totalorder %s17, 1
      %p61 = por %p59, %p60
      %p63 = scmp.ne.s32.totalorder %s46, %s62
      %p64 = scmp.eq.s32.totalorder %s17, 0
      %p65 = por %p63, %p64
      %p66 = scmp.le.s32.totalorder 1, %s11
      %p67 = scmp.lt.s32.totalorder %s11, 3
      %p68 = pnand %p66, %p67
      %p69 = pneg %p68
      // Predicated region
      $region9: #{tpu_custom_call.1} parent=5 // pred_check
        _
      $region10: #{tpu_custom_call.1} parent=5 // pred_check_branch
        %71 = sbr.rel (%p68) target = $region12
      $region11: #{tpu_custom_call.1} parent=5 // pred_region
        %s72 = ssub.s32 %s11, 1
        // Predicated region
        $region13: #{tpu_custom_call.1} parent=11 // pred_check
          %p73 = pneg %p32
        $region14: #{tpu_custom_call.1} parent=11 // pred_check_branch
          %75 = sbr.rel (%p73) target = $region16
        $region15: #{tpu_custom_call.1} parent=11 // pred_region
          %s77 = ssub.s32 128, 128
          %78 = vsyncadd [#allocation3], %s77
          %s80 = sshll.u32 [#allocation2], 4
          %s81 = int_to_ptr.vmem [resolvable:$true] %s80
          %83 = dma.hbm_to_vmem [thread:$0]  %s0, 128, %s81, [#allocation3]
        $region16: #{tpu_custom_call.1} parent=11 // pred_fallthru
          _
      $region12: #{tpu_custom_call.1} parent=5 // pred_fallthru
        _
      %p84 = scmp.lt.s32.totalorder %s11, 2
      // Predicated region
      $region17: #{tpu_custom_call.1} parent=5 // pred_check
        %p85 = pneg %p84
      $region18: #{tpu_custom_call.1} parent=5 // pred_check_branch
        %87 = sbr.rel (%p85) target = $region20
      $region19: #{tpu_custom_call.1} parent=5 // pred_region
        _
      $region20: #{tpu_custom_call.1} parent=5 // pred_fallthru
        _
      %p88 = scmp.le.s32.totalorder 1, %s11
      %p89 = scmp.lt.s32.totalorder %s11, 3
      %p90 = pnand %p88, %p89
      %p91 = pneg %p90
      // Predicated region
      $region21: #{tpu_custom_call.1} parent=5 // pred_check
        _
      $region22: #{tpu_custom_call.1} parent=5 // pred_check_branch
        %93 = sbr.rel (%p90) target = $region24
      $region23: #{tpu_custom_call.1} parent=5 // pred_region
        %s94 = ssub.s32 %s11, 1
        // Predicated region
        $region25: #{tpu_custom_call.1} parent=23 // pred_check
          %p95 = pneg %p32
        $region26: #{tpu_custom_call.1} parent=23 // pred_check_branch
          %97 = sbr.rel (%p95) target = $region28
        $region27: #{tpu_custom_call.1} parent=23 // pred_region
          %98 = dma.done [#allocation3], 128
        $region28: #{tpu_custom_call.1} parent=23 // pred_fallthru
          _
        %p99 = pneg %p32
        %p100 = pneg %p29
        %p101 = pneg %p58
        %p102 = pneg %p55
        %s103 = sand.u32 %s45, 1
        %s104 = scalar_lea.sflag [#allocation4], %s103
        %s105 = sand.u32 %s45, 1
        %s106 = smul.addr %s105, 8
        %s107 = scalar_lea.vmem [#allocation5], %s106
        %v108 = vld [vmem:[#allocation2] sm:$0xff]
        %v109 = vadd.f32 %v108, 1.0
        %110 = vst [vmem:[%s107] sm:$0xff] %v109
        %s111 = sand.u32 %s45, 1
        %s112 = scalar_lea.sflag [#allocation4], %s111
        %s113 = sand.u32 %s45, 1
        %s114 = smul.addr %s113, 8
        %s115 = scalar_lea.vmem [#allocation5], %s114
        // Predicated region
        $region29: #{tpu_custom_call.1} parent=23 // pred_check
          %p116 = pneg %p55
        $region30: #{tpu_custom_call.1} parent=23 // pred_check_branch
          %118 = sbr.rel (%p116) target = $region32
        $region31: #{tpu_custom_call.1} parent=23 // pred_region
          %s120 = ssub.s32 128, 128
          %121 = vsyncadd %s112, %s120
          %s122 = smul.addr %s16, 128
          %s123 = scalar_lea.hbm %s1, %s122
          %s125 = sshll.u32 %s115, 4
          %s126 = int_to_ptr.vmem [resolvable:$true] %s125
          %128 = dma.vmem_to_hbm [thread:$0]  %s126, 128, %s123, %s112
        $region32: #{tpu_custom_call.1} parent=23 // pred_fallthru
          _
      $region24: #{tpu_custom_call.1} parent=5 // pred_fallthru
        _
      %p129 = scmp.le.s32.totalorder 2, %s11
      // Predicated region
      $region33: #{tpu_custom_call.1} parent=5 // pred_check
        %p130 = pneg %p129
      $region34: #{tpu_custom_call.1} parent=5 // pred_check_branch
        %132 = sbr.rel (%p130) target = $region36
      $region35: #{tpu_custom_call.1} parent=5 // pred_region
        %s133 = ssub.s32 %s11, 2
        // Predicated region
        $region37: #{tpu_custom_call.1} parent=35 // pred_check
          %p134 = pneg %p61
        $region38: #{tpu_custom_call.1} parent=35 // pred_check_branch
          %136 = sbr.rel (%p134) target = $region40
        $region39: #{tpu_custom_call.1} parent=35 // pred_region
          %s137 = sand.u32 %s46, 1
          %s138 = scalar_lea.sflag [#allocation4], %s137
          %s139 = sand.u32 %s46, 1
          %s140 = smul.addr %s139, 8
          %s141 = scalar_lea.vmem [#allocation5], %s140
          %142 = dma.done %s138, 128
        $region40: #{tpu_custom_call.1} parent=35 // pred_fallthru
          _
      $region36: #{tpu_custom_call.1} parent=5 // pred_fallthru
        _
    $region6: #{tpu_custom_call.1} parent=1 // loop_footer
      %s15 = sadd.s32 1, %s11
    $region7: #{tpu_custom_call.1} parent=1 // loop_footer_branch
      %10 = sbr.rel target = $region3
    $region8: #{tpu_custom_call.1} parent=1 // loop_exit
      _
    %143 = vsyncpa [#allocation3], 1
    %s144 = scalar_lea.sflag [#allocation3], 1
    %145 = vsyncpa %s144, 1
    %146 = vsyncpa [#allocation4], 1
    %s147 = scalar_lea.sflag [#allocation4], 1
    %148 = vsyncpa %s147, 1

// kernel: tpu_custom_call.1
$region0: #{tpu_custom_call.1}
  #allocation0 [shape = 'u32[]', space=smem, size = 0x4, offset = 0x4, fixed_abs, tag = 'smem constant byte address 0x4 - core index']
  #allocation1 [shape = 'u32[144,128]{1,0:T(1,128)}', space=vmem, size = 0x12000, scoped, tag = 'internal scratch']
  %s0 = inlined_call_operand.vmem [shape: bf16[512,27], index: 0, kind: input, shape index: {}]
  %s1 = inlined_call_operand.vmem [shape: bf16[27,48], index: 1, kind: input, shape index: {}]
  %s2 = inlined_call_operand.vmem [shape: f32[1,48], index: 2, kind: input, shape index: {}]
  %s3 = inlined_call_operand.vmem [shape: f32[1,48], index: 3, kind: input, shape index: {}]
  %s4 = inlined_call_operand.vmem [shape: bf16[512,48], index: 4, kind: output, shape index: {}]
  %s5 = sld [smem:[#allocation0]]
  $region49: #{tpu_custom_call.1} parent=0
    _
  %s7 = ssub.s32 1, %s5
  %s8 = scalar_select 0, %s7, %s5
  loop: start=0, step=1, limit=4
  $region2: #{tpu_custom_call.1} parent=0 // loop_pre_header
    _
  $region3: #{tpu_custom_call.1} parent=0 // loop_header
    %s10 = sphi 0, %s14
    %p11 = scmp.ge.s32.totalorder %s10, 4
    %s17 = sphi 0, %s29
    %s18 = sphi 0, %s25
    %s19 = sphi 0, %s17
    %s20 = sphi 0, %s18
    %s21 = sphi 0, %s19
    %s22 = sphi 0, %s20
    %s32 = sphi 0, %s34
    %s35 = sphi 0, %s32
    %s36 = sphi 0, %s35
    %s52 = sphi 0, %s36
    %s58 = sphi 0, %s60
    %s61 = sphi 0, %s58
    %s62 = sphi 0, %s61
    %s78 = sphi 0, %s62
    %s84 = sphi 0, %s86
    %s87 = sphi 0, %s84
    %s88 = sphi 0, %s87
    %s104 = sphi 0, %s88
    %s110 = sphi 0, %s112
    %s113 = sphi 0, %s110
    %s114 = sphi 0, %s113
    %s130 = sphi 0, %s114
    %s138 = sphi 0, %s140
    %s141 = sphi 0, %s138
    %s142 = sphi 0, %s141
    %s158 = sphi 0, %s142
  $region4: #{tpu_custom_call.1} parent=0 // loop_header_branch
    %13 = sbr.rel (%p11) target = $region8
  $region5: #{tpu_custom_call.1} parent=0 // loop_body
    %s15 = ssub.s32 %s10, 1
    %s16 = ssub.s32 %s10, 2
    %s23 = sadd.s32 1, %s18
    %p24 = scmp.ge.s32.totalorder %s23, 1
    %s25 = scalar_select %p24, 0, %s23
    %s26 = sadd.s32 1, %s17
    %s27 = scalar_select %p24, %s26, %s17
    %p28 = scmp.ge.s32.totalorder %s27, 2
    %s29 = scalar_select %p28, 0, %s27
    %s30 = ssub.s32 %s17, %s29
    %p31 = scmp.eq.s32.totalorder %s30, 0
    %s33 = sadd.s32 %s32, 1
    %s34 = scalar_select %p31, %s32, %s33
    %p37 = pneg %p31
    %p38 = scmp.eq.s32.totalorder %s10, 1
    %p39 = por %p37, %p38
    %p40 = scmp.ne.s32.totalorder %s32, %s35
    %p41 = scmp.eq.s32.totalorder %s10, 0
    %p42 = por %p40, %p41
    %p43 = scmp.ne.s32.totalorder %s32, %s35
    %p44 = scmp.eq.s32.totalorder %s15, 1
    %p45 = por %p43, %p44
    %p46 = scmp.ne.s32.totalorder %s35, %s36
    %p47 = scmp.eq.s32.totalorder %s15, 0
    %p48 = por %p46, %p47
    %p49 = scmp.ne.s32.totalorder %s35, %s36
    %p50 = scmp.eq.s32.totalorder %s16, 1
    %p51 = por %p49, %p50
    %p53 = scmp.ne.s32.totalorder %s36, %s52
    %p54 = scmp.eq.s32.totalorder %s16, 0
    %p55 = por %p53, %p54
    %s56 = ssub.s32 %s18, %s25
    %p57 = scmp.eq.s32.totalorder %s56, 0
    %s59 = sadd.s32 %s58, 1
    %s60 = scalar_select %p57, %s58, %s59
    %p63 = pneg %p57
    %p64 = scmp.eq.s32.totalorder %s10, 1
    %p65 = por %p63, %p64
    %p66 = scmp.ne.s32.totalorder %s58, %s61
    %p67 = scmp.eq.s32.totalorder %s10, 0
    %p68 = por %p66, %p67
    %p69 = scmp.ne.s32.totalorder %s58, %s61
    %p70 = scmp.eq.s32.totalorder %s15, 1
    %p71 = por %p69, %p70
    %p72 = scmp.ne.s32.totalorder %s61, %s62
    %p73 = scmp.eq.s32.totalorder %s15, 0
    %p74 = por %p72, %p73
    %p75 = scmp.ne.s32.totalorder %s61, %s62
    %p76 = scmp.eq.s32.totalorder %s16, 1
    %p77 = por %p75, %p76
    %p79 = scmp.ne.s32.totalorder %s62, %s78
    %p80 = scmp.eq.s32.totalorder %s16, 0
    %p81 = por %p79, %p80
    %s82 = ssub.s32 %s18, %s25
    %p83 = scmp.eq.s32.totalorder %s82, 0
    %s85 = sadd.s32 %s84, 1
    %s86 = scalar_select %p83, %s84, %s85
    %p89 = pneg %p83
    %p90 = scmp.eq.s32.totalorder %s10, 1
    %p91 = por %p89, %p90
    %p92 = scmp.ne.s32.totalorder %s84, %s87
    %p93 = scmp.eq.s32.totalorder %s10, 0
    %p94 = por %p92, %p93
    %p95 = scmp.ne.s32.totalorder %s84, %s87
    %p96 = scmp.eq.s32.totalorder %s15, 1
    %p97 = por %p95, %p96
    %p98 = scmp.ne.s32.totalorder %s87, %s88
    %p99 = scmp.eq.s32.totalorder %s15, 0
    %p100 = por %p98, %p99
    %p101 = scmp.ne.s32.totalorder %s87, %s88
    %p102 = scmp.eq.s32.totalorder %s16, 1
    %p103 = por %p101, %p102
    %p105 = scmp.ne.s32.totalorder %s88, %s104
    %p106 = scmp.eq.s32.totalorder %s16, 0
    %p107 = por %p105, %p106
    %s108 = ssub.s32 %s18, %s25
    %p109 = scmp.eq.s32.totalorder %s108, 0
    %s111 = sadd.s32 %s110, 1
    %s112 = scalar_select %p109, %s110, %s111
    %p115 = pneg %p109
    %p116 = scmp.eq.s32.totalorder %s10, 1
    %p117 = por %p115, %p116
    %p118 = scmp.ne.s32.totalorder %s110, %s113
    %p119 = scmp.eq.s32.totalorder %s10, 0
    %p120 = por %p118, %p119
    %p121 = scmp.ne.s32.totalorder %s110, %s113
    %p122 = scmp.eq.s32.totalorder %s15, 1
    %p123 = por %p121, %p122
    %p124 = scmp.ne.s32.totalorder %s113, %s114
    %p125 = scmp.eq.s32.totalorder %s15, 0
    %p126 = por %p124, %p125
    %p127 = scmp.ne.s32.totalorder %s113, %s114
    %p128 = scmp.eq.s32.totalorder %s16, 1
    %p129 = por %p127, %p128
    %p131 = scmp.ne.s32.totalorder %s114, %s130
    %p132 = scmp.eq.s32.totalorder %s16, 0
    %p133 = por %p131, %p132
    %s134 = ssub.s32 %s17, %s29
    %s135 = ssub.s32 %s18, %s25
    %s136 = sor.u32 %s134, %s135
    %p137 = scmp.eq.s32.totalorder %s136, 0
    %s139 = sadd.s32 %s138, 1
    %s140 = scalar_select %p137, %s138, %s139
    %p143 = pneg %p137
    %p144 = scmp.eq.s32.totalorder %s10, 1
    %p145 = por %p143, %p144
    %p146 = scmp.ne.s32.totalorder %s138, %s141
    %p147 = scmp.eq.s32.totalorder %s10, 0
    %p148 = por %p146, %p147
    %p149 = scmp.ne.s32.totalorder %s138, %s141
    %p150 = scmp.eq.s32.totalorder %s15, 1
    %p151 = por %p149, %p150
    %p152 = scmp.ne.s32.totalorder %s141, %s142
    %p153 = scmp.eq.s32.totalorder %s15, 0
    %p154 = por %p152, %p153
    %p155 = scmp.ne.s32.totalorder %s141, %s142
    %p156 = scmp.eq.s32.totalorder %s16, 1
    %p157 = por %p155, %p156
    %p159 = scmp.ne.s32.totalorder %s142, %s158
    %p160 = scmp.eq.s32.totalorder %s16, 0
    %p161 = por %p159, %p160
    %p162 = scmp.le.s32.totalorder 1, %s10
    %p163 = scmp.lt.s32.totalorder %s10, 3
    %p164 = pnand %p162, %p163
    %p165 = pneg %p164
    // Predicated region
    $region9: #{tpu_custom_call.1} parent=5 // pred_check
      _
    $region10: #{tpu_custom_call.1} parent=5 // pred_check_branch
      %167 = sbr.rel (%p164) target = $region12
    $region11: #{tpu_custom_call.1} parent=5 // pred_region
      %s168 = ssub.s32 %s10, 1
      // Predicated region
      $region13: #{tpu_custom_call.1} parent=11 // pred_check
        %p169 = pneg %p74
      $region14: #{tpu_custom_call.1} parent=11 // pred_check_branch
        %171 = sbr.rel (%p169) target = $region16
      $region15: #{tpu_custom_call.1} parent=11 // pred_region
        %p172 = scmp.lt.s32.totalorder %s20, 0
        %s173 = scalar_select %p172, %s20, 0
        %s174 = smul.addr %s173, 4
        %s175 = scalar_lea.vmem %s1, %s174
      $region16: #{tpu_custom_call.1} parent=11 // pred_fallthru
        _
      // Predicated region
      $region17: #{tpu_custom_call.1} parent=11 // pred_check
        %p176 = pneg %p100
      $region18: #{tpu_custom_call.1} parent=11 // pred_check_branch
        %178 = sbr.rel (%p176) target = $region20
      $region19: #{tpu_custom_call.1} parent=11 // pred_region
        %p179 = scmp.lt.s32.totalorder %s20, 0
        %s180 = scalar_select %p179, %s20, 0
        %s181 = scalar_lea.vmem %s2, %s180
      $region20: #{tpu_custom_call.1} parent=11 // pred_fallthru
        _
      // Predicated region
      $region21: #{tpu_custom_call.1} parent=11 // pred_check
        %p182 = pneg %p126
      $region22: #{tpu_custom_call.1} parent=11 // pred_check_branch
        %184 = sbr.rel (%p182) target = $region24
      $region23: #{tpu_custom_call.1} parent=11 // pred_region
        %p185 = scmp.lt.s32.totalorder %s20, 0
        %s186 = scalar_select %p185, %s20, 0
        %s187 = scalar_lea.vmem %s3, %s186
      $region24: #{tpu_custom_call.1} parent=11 // pred_fallthru
        _
    $region12: #{tpu_custom_call.1} parent=5 // pred_fallthru
      _
    %p188 = scmp.lt.s32.totalorder %s10, 2
    // Predicated region
    $region25: #{tpu_custom_call.1} parent=5 // pred_check
      %p189 = pneg %p188
    $region26: #{tpu_custom_call.1} parent=5 // pred_check_branch
      %191 = sbr.rel (%p189) target = $region28
    $region27: #{tpu_custom_call.1} parent=5 // pred_region
      // Predicated region
      $region29: #{tpu_custom_call.1} parent=27 // pred_check
        %p192 = pneg %p42
      $region30: #{tpu_custom_call.1} parent=27 // pred_check_branch
        %194 = sbr.rel (%p192) target = $region32
      $region31: #{tpu_custom_call.1} parent=27 // pred_region
        %s195 = smul.u32 32, %s17
        %p196 = scmp.lt.s32.totalorder %s195, 63
        %s197 = scalar_select %p196, %s195, 63
        %s198 = smul.addr %s197, 4
        %s199 = scalar_lea.vmem %s0, %s198
        %s200 = smul.u32 32, %s17
      $region32: #{tpu_custom_call.1} parent=27 // pred_fallthru
        _
    $region28: #{tpu_custom_call.1} parent=5 // pred_fallthru
      _
    %p201 = scmp.le.s32.totalorder 1, %s10
    %p202 = scmp.lt.s32.totalorder %s10, 3
    %p203 = pnand %p201, %p202
    %p204 = pneg %p203
    // Predicated region
    $region33: #{tpu_custom_call.1} parent=5 // pred_check
      _
    $region34: #{tpu_custom_call.1} parent=5 // pred_check_branch
      %206 = sbr.rel (%p203) target = $region36
    $region35: #{tpu_custom_call.1} parent=5 // pred_region
      %s207 = ssub.s32 %s10, 1
      %s208 = smul.u32 32, %s19
      %p209 = scmp.lt.s32.totalorder %s208, 63
      %s210 = scalar_select %p209, %s208, 63
      %s211 = smul.addr %s210, 4
      %s212 = scalar_lea.vmem %s0, %s211
      %p213 = pneg %p48
      %p214 = pneg %p45
      %p215 = scmp.lt.s32.totalorder %s20, 0
      %s216 = scalar_select %p215, %s20, 0
      %s217 = smul.addr %s216, 4
      %s218 = scalar_lea.vmem %s1, %s217
      %p219 = pneg %p74
      %p220 = pneg %p71
      %p221 = scmp.lt.s32.totalorder %s20, 0
      %s222 = scalar_select %p221, %s20, 0
      %s223 = scalar_lea.vmem %s2, %s222
      %p224 = pneg %p100
      %p225 = pneg %p97
      %p226 = scmp.lt.s32.totalorder %s20, 0
      %s227 = scalar_select %p226, %s20, 0
      %s228 = scalar_lea.vmem %s3, %s227
      %p229 = pneg %p126
      %p230 = pneg %p123
      %p231 = pneg %p154
      %p232 = pneg %p151
      %s233 = smul.u32 32, %s19
      %p234 = scmp.lt.s32.totalorder %s233, 63
      %s235 = scalar_select %p234, %s233, 63
      %p236 = scmp.lt.s32.totalorder %s20, 0
      %s237 = scalar_select %p236, %s20, 0
      %s238 = sadd.s32 %s237, %s235
      %s239 = smul.addr %s238, 4
      %s240 = scalar_lea.vmem %s4, %s239
      %s241 = smul.u32 32, %s19
      %p242 = scmp.lt.s32.totalorder %s241, 63
      %s243 = scalar_select %p242, %s241, 63
      %s244 = smul.addr %s243, 4
      %s245 = scalar_lea.vmem %s0, %s244
      %s246 = smul.u32 32, %s19
      %p247 = scmp.lt.s32.totalorder %s20, 0
      %s248 = scalar_select %p247, %s20, 0
      %s249 = smul.addr %s248, 4
      %s250 = scalar_lea.vmem %s1, %s249
      %p251 = scmp.lt.s32.totalorder %s20, 0
      %s252 = scalar_select %p251, %s20, 0
      %s253 = scalar_lea.vmem %s2, %s252
      %p254 = scmp.lt.s32.totalorder %s20, 0
      %s255 = scalar_select %p254, %s20, 0
      %s256 = scalar_lea.vmem %s3, %s255
      %s257 = smul.u32 32, %s19
      %p258 = scmp.lt.s32.totalorder %s257, 63
      %s259 = scalar_select %p258, %s257, 63
      %p260 = scmp.lt.s32.totalorder %s20, 0
      %s261 = scalar_select %p260, %s20, 0
      %s262 = sadd.s32 %s261, %s259
      %s263 = smul.addr %s262, 4
      %s264 = scalar_lea.vmem %s4, %s263
      %s265 = smul.u32 32, %s19
      %v267 = vld [vmem:[%s245] sm:$0xf]
      %v268 = vld [vmem:[%s245 + $0x4] sm:$0xf]
      %v269 = vld [vmem:[%s245 + $0x8] sm:$0xf]
      %v270 = vld [vmem:[%s245 + $0xc] sm:$0xf]
      %v271 = vld [vmem:[%s245 + $0x10] sm:$0xf]
      %v272 = vld [vmem:[%s245 + $0x14] sm:$0xf]
      %v273 = vld [vmem:[%s245 + $0x18] sm:$0xf]
      %v274 = vld [vmem:[%s245 + $0x1c] sm:$0xf]
      %v275 = vld [vmem:[%s245 + $0x20] sm:$0xf]
      %v276 = vld [vmem:[%s245 + $0x24] sm:$0xf]
      %v277 = vld [vmem:[%s245 + $0x28] sm:$0xf]
      %v278 = vld [vmem:[%s245 + $0x2c] sm:$0xf]
      %v279 = vld [vmem:[%s245 + $0x30] sm:$0xf]
      %v280 = vld [vmem:[%s245 + $0x34] sm:$0xf]
      %v281 = vld [vmem:[%s245 + $0x38] sm:$0xf]
      %v282 = vld [vmem:[%s245 + $0x3c] sm:$0xf]
      %v283 = vld [vmem:[%s245 + $0x40] sm:$0xf]
      %v284 = vld [vmem:[%s245 + $0x44] sm:$0xf]
      %v285 = vld [vmem:[%s245 + $0x48] sm:$0xf]
      %v286 = vld [vmem:[%s245 + $0x4c] sm:$0xf]
      %v287 = vld [vmem:[%s245 + $0x50] sm:$0xf]
      %v288 = vld [vmem:[%s245 + $0x54] sm:$0xf]
      %v289 = vld [vmem:[%s245 + $0x58] sm:$0xf]
      %v290 = vld [vmem:[%s245 + $0x5c] sm:$0xf]
      %v291 = vld [vmem:[%s245 + $0x60] sm:$0xf]
      %v292 = vld [vmem:[%s245 + $0x64] sm:$0xf]
      %v293 = vld [vmem:[%s245 + $0x68] sm:$0xf]
      %v294 = vld [vmem:[%s245 + $0x6c] sm:$0xf]
      %v295 = vld [vmem:[%s245 + $0x70] sm:$0xf]
      %v296 = vld [vmem:[%s245 + $0x74] sm:$0xf]
      %v297 = vld [vmem:[%s245 + $0x78] sm:$0xf]
      %v298 = vld [vmem:[%s245 + $0x7c] sm:$0xf]
      %v299 = vld [vmem:[%s250] sm:$0xf]
      %v300 = vld [vmem:[%s250 + $0x4] sm:$0xf]
      %v301 = vld [vmem:[%s250 + $0x8] sm:$0xf]
      %v302 = vld [vmem:[%s250 + $0xc] sm:$0x3]
      %v335 = vunpack.c.l.b16 %v267
      %v336 = vunpack.c.l.b16 %v268
      %v337 = vunpack.c.l.b16 %v269
      %v338 = vunpack.c.l.b16 %v270
      %v339 = vunpack.c.l.b16 %v271
      %v340 = vunpack.c.l.b16 %v272
      %v341 = vunpack.c.l.b16 %v273
      %v342 = vunpack.c.l.b16 %v274
      %v343 = vunpack.c.l.b16 %v275
      %v344 = vunpack.c.l.b16 %v276
      %v345 = vunpack.c.l.b16 %v277
      %v346 = vunpack.c.l.b16 %v278
      %v347 = vunpack.c.l.b16 %v279
      %v348 = vunpack.c.l.b16 %v280
      %v349 = vunpack.c.l.b16 %v281
      %v350 = vunpack.c.l.b16 %v282
      %v351 = vunpack.c.l.b16 %v283
      %v352 = vunpack.c.l.b16 %v284
      %v353 = vunpack.c.l.b16 %v285
      %v354 = vunpack.c.l.b16 %v286
      %v355 = vunpack.c.l.b16 %v287
      %v356 = vunpack.c.l.b16 %v288
      %v357 = vunpack.c.l.b16 %v289
      %v358 = vunpack.c.l.b16 %v290
      %v359 = vunpack.c.l.b16 %v291
      %v360 = vunpack.c.l.b16 %v292
      %v361 = vunpack.c.l.b16 %v293
      %v362 = vunpack.c.l.b16 %v294
      %v363 = vunpack.c.l.b16 %v295
      %v364 = vunpack.c.l.b16 %v296
      %v365 = vunpack.c.l.b16 %v297
      %v366 = vunpack.c.l.b16 %v298
      %v367 = vpack.c.b16 %v336, %v335
      %v368 = vpack.c.b16 %v338, %v337
      %v369 = vpack.c.b16 %v340, %v339
      %v370 = vpack.c.b16 %v342, %v341
      %v371 = vpack.c.b16 %v344, %v343
      %v372 = vpack.c.b16 %v346, %v345
      %v373 = vpack.c.b16 %v348, %v347
      %v374 = vpack.c.b16 %v350, %v349
      %v375 = vpack.c.b16 %v352, %v351
      %v376 = vpack.c.b16 %v354, %v353
      %v377 = vpack.c.b16 %v356, %v355
      %v378 = vpack.c.b16 %v358, %v357
      %v379 = vpack.c.b16 %v360, %v359
      %v380 = vpack.c.b16 %v362, %v361
      %v381 = vpack.c.b16 %v364, %v363
      %v382 = vpack.c.b16 %v366, %v365
      %v387 = vunpack.c.l.b16 %v299
      %v388 = vunpack.c.l.b16 %v300
      %v389 = vunpack.c.l.b16 %v301
      %v390 = vunpack.c.l.b16 %v302
      %v391 = vpack.c.b16 %v388, %v387
      %v392 = vpack.c.b16 %v390, %v389
      %vm394 = vcmask 220160
      %v396 = vsel %vm394, %v367, 0
      %v399 = vsel %vm394, %v368, 0
      %v402 = vsel %vm394, %v369, 0
      %v405 = vsel %vm394, %v370, 0
      %v408 = vsel %vm394, %v371, 0
      %v411 = vsel %vm394, %v372, 0
      %v414 = vsel %vm394, %v373, 0
      %v417 = vsel %vm394, %v374, 0
      %v420 = vsel %vm394, %v375, 0
      %v423 = vsel %vm394, %v376, 0
      %v426 = vsel %vm394, %v377, 0
      %v429 = vsel %vm394, %v378, 0
      %v432 = vsel %vm394, %v379, 0
      %v435 = vsel %vm394, %v380, 0
      %v438 = vsel %vm394, %v381, 0
      %v441 = vsel %vm394, %v382, 0
      %vm443 = vcmask 1044480
      %vm444 = vcmask 1045504
      %v445 = vsel %vm443, 4294967295, 65535
      %v446 = vsel %vm444, %v445, 0
      %v448 = vand.u32 %v392, %v446
      %450 = vmatprep.subr.bf16.mxu0 0
      %451 = vmatpush1.bf16.msra.mxu0 0
      %452 = vmatprep.subr.bf16.mxu0 0
      %453 = vmatpush1.bf16.msra.mxu0 0
      %454 = vmatprep.subr.bf16.mxu0 0
      %455 = vmatpush1.bf16.msra.mxu0 0
      %456 = vmatprep.subr.bf16.mxu0 0
      %457 = vmatpush1.bf16.msra.mxu0 0
      %458 = vmatprep.subr.bf16.mxu0 0
      %459 = vmatpush1.bf16.msra.mxu0 0
      %460 = vmatprep.subr.bf16.mxu0 0
      %461 = vmatpush1.bf16.msra.mxu0 0
      %462 = vmatprep.subr.bf16.mxu0 0
      %463 = vmatpush1.bf16.msra.mxu0 %v448
      %464 = vmatprep.subr.bf16.mxu0 0
      %465 = vmatpush1.bf16.msra.mxu0 %v391
      %466 = vmatprep.subr.bf16.mxu0 0
      %467 = vmatpush2.bf16.msra.mxu0 0
      %468 = vmatprep.subr.bf16.mxu0 0
      %469 = vmatpush2.bf16.msra.mxu0 0
      %470 = vmatprep.subr.bf16.mxu0 0
      %471 = vmatpush2.bf16.msra.mxu0 0
      %472 = vmatprep.subr.bf16.mxu0 0
      %473 = vmatpush2.bf16.msra.mxu0 0
      %474 = vmatprep.subr.bf16.mxu0 0
      %475 = vmatpush2.bf16.msra.mxu0 0
      %476 = vmatprep.subr.bf16.mxu0 0
      %477 = vmatpush2.bf16.msra.mxu0 0
      %478 = vmatprep.subr.bf16.mxu0 0
      %479 = vmatpush2.bf16.msra.mxu0 0
      %480 = vmatprep.subr.bf16.mxu0 0
      %481 = vmatpush2.bf16.msra.mxu0 0
      %482 = vmatprep.mubr.bf16.mxu0 0
      %483 = vmatmul.mubr.bf16.gmra.mxu0 %v396
      %v484 = vpop.f32.mrf.mxu0
      %v485 = vadd.f32 0.0, %v484
      %v486 = vpop.f32.mrf.mxu0
      %v487 = vpop.f32.mrf.mxu0
      %v488 = vadd.f32 0.0, %v487
      %v489 = vpop.f32.mrf.mxu0
      %490 = vmatprep.mubr.bf16.mxu0 0
      %491 = vmatmul.mubr.bf16.gmra.mxu0 %v399
      %v492 = vpop.f32.mrf.mxu0
      %v493 = vadd.f32 0.0, %v492
      %v494 = vpop.f32.mrf.mxu0
      %v495 = vpop.f32.mrf.mxu0
      %v496 = vadd.f32 0.0, %v495
      %v497 = vpop.f32.mrf.mxu0
      %498 = vmatprep.mubr.bf16.mxu0 0
      %499 = vmatmul.mubr.bf16.gmra.mxu0 %v402
      %v500 = vpop.f32.mrf.mxu0
      %v501 = vadd.f32 0.0, %v500
      %v502 = vpop.f32.mrf.mxu0
      %v503 = vpop.f32.mrf.mxu0
      %v504 = vadd.f32 0.0, %v503
      %v505 = vpop.f32.mrf.mxu0
      %506 = vmatprep.mubr.bf16.mxu0 0
      %507 = vmatmul.mubr.bf16.gmra.mxu0 %v405
      %v508 = vpop.f32.mrf.mxu0
      %v509 = vadd.f32 0.0, %v508
      %v510 = vpop.f32.mrf.mxu0
      %v511 = vpop.f32.mrf.mxu0
      %v512 = vadd.f32 0.0, %v511
      %v513 = vpop.f32.mrf.mxu0
      %514 = vmatprep.mubr.bf16.mxu0 0
      %515 = vmatmul.mubr.bf16.gmra.mxu0 %v408
      %v516 = vpop.f32.mrf.mxu0
      %v517 = vadd.f32 0.0, %v516
      %v518 = vpop.f32.mrf.mxu0
      %v519 = vpop.f32.mrf.mxu0
      %v520 = vadd.f32 0.0, %v519
      %v521 = vpop.f32.mrf.mxu0
      %522 = vmatprep.mubr.bf16.mxu0 0
      %523 = vmatmul.mubr.bf16.gmra.mxu0 %v411
      %v524 = vpop.f32.mrf.mxu0
      %v525 = vadd.f32 0.0, %v524
      %v526 = vpop.f32.mrf.mxu0
      %v527 = vpop.f32.mrf.mxu0
      %v528 = vadd.f32 0.0, %v527
      %v529 = vpop.f32.mrf.mxu0
      %530 = vmatprep.mubr.bf16.mxu0 0
      %531 = vmatmul.mubr.bf16.gmra.mxu0 %v414
      %v532 = vpop.f32.mrf.mxu0
      %v533 = vadd.f32 0.0, %v532
      %v534 = vpop.f32.mrf.mxu0
      %v535 = vpop.f32.mrf.mxu0
      %v536 = vadd.f32 0.0, %v535
      %v537 = vpop.f32.mrf.mxu0
      %538 = vmatprep.mubr.bf16.mxu0 0
      %539 = vmatmul.mubr.bf16.gmra.mxu0 %v417
      %v540 = vpop.f32.mrf.mxu0
      %v541 = vadd.f32 0.0, %v540
      %v542 = vpop.f32.mrf.mxu0
      %v543 = vpop.f32.mrf.mxu0
      %v544 = vadd.f32 0.0, %v543
      %v545 = vpop.f32.mrf.mxu0
      %546 = vmatprep.mubr.bf16.mxu0 0
      %547 = vmatmul.mubr.bf16.gmra.mxu0 %v420
      %v548 = vpop.f32.mrf.mxu0
      %v549 = vadd.f32 0.0, %v548
      %v550 = vpop.f32.mrf.mxu0
      %v551 = vpop.f32.mrf.mxu0
      %v552 = vadd.f32 0.0, %v551
      %v553 = vpop.f32.mrf.mxu0
      %554 = vmatprep.mubr.bf16.mxu0 0
      %555 = vmatmul.mubr.bf16.gmra.mxu0 %v423
      %v556 = vpop.f32.mrf.mxu0
      %v557 = vadd.f32 0.0, %v556
      %v558 = vpop.f32.mrf.mxu0
      %v559 = vpop.f32.mrf.mxu0
      %v560 = vadd.f32 0.0, %v559
      %v561 = vpop.f32.mrf.mxu0
      %562 = vmatprep.mubr.bf16.mxu0 0
      %563 = vmatmul.mubr.bf16.gmra.mxu0 %v426
      %v564 = vpop.f32.mrf.mxu0
      %v565 = vadd.f32 0.0, %v564
      %v566 = vpop.f32.mrf.mxu0
      %v567 = vpop.f32.mrf.mxu0
      %v568 = vadd.f32 0.0, %v567
      %v569 = vpop.f32.mrf.mxu0
      %570 = vmatprep.mubr.bf16.mxu0 0
      %571 = vmatmul.mubr.bf16.gmra.mxu0 %v429
      %v572 = vpop.f32.mrf.mxu0
      %v573 = vadd.f32 0.0, %v572
      %v574 = vpop.f32.mrf.mxu0
      %v575 = vpop.f32.mrf.mxu0
      %v576 = vadd.f32 0.0, %v575
      %v577 = vpop.f32.mrf.mxu0
      %578 = vmatprep.mubr.bf16.mxu0 0
      %579 = vmatmul.mubr.bf16.gmra.mxu0 %v432
      %v580 = vpop.f32.mrf.mxu0
      %v581 = vadd.f32 0.0, %v580
      %v582 = vpop.f32.mrf.mxu0
      %v583 = vpop.f32.mrf.mxu0
      %v584 = vadd.f32 0.0, %v583
      %v585 = vpop.f32.mrf.mxu0
      %586 = vmatprep.mubr.bf16.mxu0 0
      %587 = vmatmul.mubr.bf16.gmra.mxu0 %v435
      %v588 = vpop.f32.mrf.mxu0
      %v589 = vadd.f32 0.0, %v588
      %v590 = vpop.f32.mrf.mxu0
      %v591 = vpop.f32.mrf.mxu0
      %v592 = vadd.f32 0.0, %v591
      %v593 = vpop.f32.mrf.mxu0
      %594 = vmatprep.mubr.bf16.mxu0 0
      %595 = vmatmul.mubr.bf16.gmra.mxu0 %v438
      %v596 = vpop.f32.mrf.mxu0
      %v597 = vadd.f32 0.0, %v596
      %v598 = vpop.f32.mrf.mxu0
      %v599 = vpop.f32.mrf.mxu0
      %v600 = vadd.f32 0.0, %v599
      %v601 = vpop.f32.mrf.mxu0
      %602 = vmatprep.mubr.bf16.mxu0 0
      %603 = vmatmul.mubr.bf16.gmra.mxu0 %v441
      %v604 = vpop.f32.mrf.mxu0
      %v605 = vadd.f32 0.0, %v604
      %v606 = vpop.f32.mrf.mxu0
      %v607 = vpop.f32.mrf.mxu0
      %v608 = vadd.f32 0.0, %v607
      %v609 = vpop.f32.mrf.mxu0
      %610 = vdwg.mxu0
      %v611 = vld [vmem:[%s253] sm:$0x1]
      %v613 = vlaneseq
      %v614 = vshrl.u32 %v613, 7
      %v615 = vsub.s32 0, %v614
      %v616 = vrot.slane %v611, %v615
      %v618 = vmul.f32 %v485, %v616
      %v619 = vmul.f32 %v488, %v616
      %v620 = vmul.f32 %v493, %v616
      %v621 = vmul.f32 %v496, %v616
      %v622 = vmul.f32 %v501, %v616
      %v623 = vmul.f32 %v504, %v616
      %v624 = vmul.f32 %v509, %v616
      %v625 = vmul.f32 %v512, %v616
      %v626 = vmul.f32 %v517, %v616
      %v627 = vmul.f32 %v520, %v616
      %v628 = vmul.f32 %v525, %v616
      %v629 = vmul.f32 %v528, %v616
      %v630 = vmul.f32 %v533, %v616
      %v631 = vmul.f32 %v536, %v616
      %v632 = vmul.f32 %v541, %v616
      %v633 = vmul.f32 %v544, %v616
      %v634 = vmul.f32 %v549, %v616
      %v635 = vmul.f32 %v552, %v616
      %v636 = vmul.f32 %v557, %v616
      %v637 = vmul.f32 %v560, %v616
      %v638 = vmul.f32 %v565, %v616
      %v639 = vmul.f32 %v568, %v616
      %v640 = vmul.f32 %v573, %v616
      %v641 = vmul.f32 %v576, %v616
      %v642 = vmul.f32 %v581, %v616
      %v643 = vmul.f32 %v584, %v616
      %v644 = vmul.f32 %v589, %v616
      %v645 = vmul.f32 %v592, %v616
      %v646 = vmul.f32 %v597, %v616
      %v647 = vmul.f32 %v600, %v616
      %v648 = vmul.f32 %v605, %v616
      %v649 = vmul.f32 %v608, %v616
      %v650 = vld [vmem:[%s256] sm:$0x1]
      %v652 = vlaneseq
      %v653 = vshrl.u32 %v652, 7
      %v654 = vsub.s32 0, %v653
      %v655 = vrot.slane %v650, %v654
      %v657 = vadd.f32 %v618, %v655
      %v658 = vadd.f32 %v619, %v655
      %v659 = vadd.f32 %v620, %v655
      %v660 = vadd.f32 %v621, %v655
      %v661 = vadd.f32 %v622, %v655
      %v662 = vadd.f32 %v623, %v655
      %v663 = vadd.f32 %v624, %v655
      %v664 = vadd.f32 %v625, %v655
      %v665 = vadd.f32 %v626, %v655
      %v666 = vadd.f32 %v627, %v655
      %v667 = vadd.f32 %v628, %v655
      %v668 = vadd.f32 %v629, %v655
      %v669 = vadd.f32 %v630, %v655
      %v670 = vadd.f32 %v631, %v655
      %v671 = vadd.f32 %v632, %v655
      %v672 = vadd.f32 %v633, %v655
      %v673 = vadd.f32 %v634, %v655
      %v674 = vadd.f32 %v635, %v655
      %v675 = vadd.f32 %v636, %v655
      %v676 = vadd.f32 %v637, %v655
      %v677 = vadd.f32 %v638, %v655
      %v678 = vadd.f32 %v639, %v655
      %v679 = vadd.f32 %v640, %v655
      %v680 = vadd.f32 %v641, %v655
      %v681 = vadd.f32 %v642, %v655
      %v682 = vadd.f32 %v643, %v655
      %v683 = vadd.f32 %v644, %v655
      %v684 = vadd.f32 %v645, %v655
      %v685 = vadd.f32 %v646, %v655
      %v686 = vadd.f32 %v647, %v655
      %v687 = vadd.f32 %v648, %v655
      %v688 = vadd.f32 %v649, %v655
      %v689 = vxor.u32 %v657, 2147483648
      %v690 = vxor.u32 %v658, 2147483648
      %v691 = vxor.u32 %v659, 2147483648
      %v692 = vxor.u32 %v660, 2147483648
      %v693 = vxor.u32 %v661, 2147483648
      %v694 = vxor.u32 %v662, 2147483648
      %v695 = vxor.u32 %v663, 2147483648
      %v696 = vxor.u32 %v664, 2147483648
      %v697 = vxor.u32 %v665, 2147483648
      %v698 = vxor.u32 %v666, 2147483648
      %v699 = vxor.u32 %v667, 2147483648
      %v700 = vxor.u32 %v668, 2147483648
      %v701 = vxor.u32 %v669, 2147483648
      %v702 = vxor.u32 %v670, 2147483648
      %v703 = vxor.u32 %v671, 2147483648
      %v704 = vxor.u32 %v672, 2147483648
      %v705 = vxor.u32 %v673, 2147483648
      %v706 = vxor.u32 %v674, 2147483648
      %v707 = vxor.u32 %v675, 2147483648
      %v708 = vxor.u32 %v676, 2147483648
      %v709 = vxor.u32 %v677, 2147483648
      %v710 = vxor.u32 %v678, 2147483648
      %v711 = vxor.u32 %v679, 2147483648
      %v712 = vxor.u32 %v680, 2147483648
      %v713 = vxor.u32 %v681, 2147483648
      %v714 = vxor.u32 %v682, 2147483648
      %v715 = vxor.u32 %v683, 2147483648
      %v716 = vxor.u32 %v684, 2147483648
      %v717 = vxor.u32 %v685, 2147483648
      %v718 = vxor.u32 %v686, 2147483648
      %v719 = vxor.u32 %v687, 2147483648
      %v720 = vxor.u32 %v688, 2147483648
      %v721 = vmul.f32 %v689, 1.442695
      %v722 = vpow.pop %v721
      %v723 = vmul.f32 %v690, 1.442695
      %v724 = vpow.pop %v723
      %v725 = vmul.f32 %v691, 1.442695
      %v726 = vpow.pop %v725
      %v727 = vmul.f32 %v692, 1.442695
      %v728 = vpow.pop %v727
      %v729 = vmul.f32 %v693, 1.442695
      %v730 = vpow.pop %v729
      %v731 = vmul.f32 %v694, 1.442695
      %v732 = vpow.pop %v731
      %v733 = vmul.f32 %v695, 1.442695
      %v734 = vpow.pop %v733
      %v735 = vmul.f32 %v696, 1.442695
      %v736 = vpow.pop %v735
      %v737 = vmul.f32 %v697, 1.442695
      %v738 = vpow.pop %v737
      %v739 = vmul.f32 %v698, 1.442695
      %v740 = vpow.pop %v739
      %v741 = vmul.f32 %v699, 1.442695
      %v742 = vpow.pop %v741
      %v743 = vmul.f32 %v700, 1.442695
      %v744 = vpow.pop %v743
      %v745 = vmul.f32 %v701, 1.442695
      %v746 = vpow.pop %v745
      %v747 = vmul.f32 %v702, 1.442695
      %v748 = vpow.pop %v747
      %v749 = vmul.f32 %v703, 1.442695
      %v750 = vpow.pop %v749
      %v751 = vmul.f32 %v704, 1.442695
      %v752 = vpow.pop %v751
      %v753 = vmul.f32 %v705, 1.442695
      %v754 = vpow.pop %v753
      %v755 = vmul.f32 %v706, 1.442695
      %v756 = vpow.pop %v755
      %v757 = vmul.f32 %v707, 1.442695
      %v758 = vpow.pop %v757
      %v759 = vmul.f32 %v708, 1.442695
      %v760 = vpow.pop %v759
      %v761 = vmul.f32 %v709, 1.442695
      %v762 = vpow.pop %v761
      %v763 = vmul.f32 %v710, 1.442695
      %v764 = vpow.pop %v763
      %v765 = vmul.f32 %v711, 1.442695
      %v766 = vpow.pop %v765
      %v767 = vmul.f32 %v712, 1.442695
      %v768 = vpow.pop %v767
      %v769 = vmul.f32 %v713, 1.442695
      %v770 = vpow.pop %v769
      %v771 = vmul.f32 %v714, 1.442695
      %v772 = vpow.pop %v771
      %v773 = vmul.f32 %v715, 1.442695
      %v774 = vpow.pop %v773
      %v775 = vmul.f32 %v716, 1.442695
      %v776 = vpow.pop %v775
      %v777 = vmul.f32 %v717, 1.442695
      %v778 = vpow.pop %v777
      %v779 = vmul.f32 %v718, 1.442695
      %v780 = vpow.pop %v779
      %v781 = vmul.f32 %v719, 1.442695
      %v782 = vpow.pop %v781
      %v783 = vmul.f32 %v720, 1.442695
      %v784 = vpow.pop %v783
      %v785 = vadd.f32 %v722, 1.0
      %v786 = vadd.f32 %v724, 1.0
      %v787 = vadd.f32 %v726, 1.0
      %v788 = vadd.f32 %v728, 1.0
      %v789 = vadd.f32 %v730, 1.0
      %v790 = vadd.f32 %v732, 1.0
      %v791 = vadd.f32 %v734, 1.0
      %v792 = vadd.f32 %v736, 1.0
      %v793 = vadd.f32 %v738, 1.0
      %v794 = vadd.f32 %v740, 1.0
      %v795 = vadd.f32 %v742, 1.0
      %v796 = vadd.f32 %v744, 1.0
      %v797 = vadd.f32 %v746, 1.0
      %v798 = vadd.f32 %v748, 1.0
      %v799 = vadd.f32 %v750, 1.0
      %v800 = vadd.f32 %v752, 1.0
      %v801 = vadd.f32 %v754, 1.0
      %v802 = vadd.f32 %v756, 1.0
      %v803 = vadd.f32 %v758, 1.0
      %v804 = vadd.f32 %v760, 1.0
      %v805 = vadd.f32 %v762, 1.0
      %v806 = vadd.f32 %v764, 1.0
      %v807 = vadd.f32 %v766, 1.0
      %v808 = vadd.f32 %v768, 1.0
      %v809 = vadd.f32 %v770, 1.0
      %v810 = vadd.f32 %v772, 1.0
      %v811 = vadd.f32 %v774, 1.0
      %v812 = vadd.f32 %v776, 1.0
      %v813 = vadd.f32 %v778, 1.0
      %v814 = vadd.f32 %v780, 1.0
      %v815 = vadd.f32 %v782, 1.0
      %v816 = vadd.f32 %v784, 1.0
      %v817 = vrcp.pop %v785
      %v818 = vmul.f32 1.0, %v817
      %v819 = vrcp.pop %v786
      %v820 = vmul.f32 1.0, %v819
      %v821 = vrcp.pop %v787
      %v822 = vmul.f32 1.0, %v821
      %v823 = vrcp.pop %v788
      %v824 = vmul.f32 1.0, %v823
      %v825 = vrcp.pop %v789
      %v826 = vmul.f32 1.0, %v825
      %v827 = vrcp.pop %v790
      %v828 = vmul.f32 1.0, %v827
      %v829 = vrcp.pop %v791
      %v830 = vmul.f32 1.0, %v829
      %v831 = vrcp.pop %v792
      %v832 = vmul.f32 1.0, %v831
      %v833 = vrcp.pop %v793
      %v834 = vmul.f32 1.0, %v833
      %v835 = vrcp.pop %v794
      %v836 = vmul.f32 1.0, %v835
      %v837 = vrcp.pop %v795
      %v838 = vmul.f32 1.0, %v837
      %v839 = vrcp.pop %v796
      %v840 = vmul.f32 1.0, %v839
      %v841 = vrcp.pop %v797
      %v842 = vmul.f32 1.0, %v841
      %v843 = vrcp.pop %v798
      %v844 = vmul.f32 1.0, %v843
      %v845 = vrcp.pop %v799
      %v846 = vmul.f32 1.0, %v845
      %v847 = vrcp.pop %v800
      %v848 = vmul.f32 1.0, %v847
      %v849 = vrcp.pop %v801
      %v850 = vmul.f32 1.0, %v849
      %v851 = vrcp.pop %v802
      %v852 = vmul.f32 1.0, %v851
      %v853 = vrcp.pop %v803
      %v854 = vmul.f32 1.0, %v853
      %v855 = vrcp.pop %v804
      %v856 = vmul.f32 1.0, %v855
      %v857 = vrcp.pop %v805
      %v858 = vmul.f32 1.0, %v857
      %v859 = vrcp.pop %v806
      %v860 = vmul.f32 1.0, %v859
      %v861 = vrcp.pop %v807
      %v862 = vmul.f32 1.0, %v861
      %v863 = vrcp.pop %v808
      %v864 = vmul.f32 1.0, %v863
      %v865 = vrcp.pop %v809
      %v866 = vmul.f32 1.0, %v865
      %v867 = vrcp.pop %v810
      %v868 = vmul.f32 1.0, %v867
      %v869 = vrcp.pop %v811
      %v870 = vmul.f32 1.0, %v869
      %v871 = vrcp.pop %v812
      %v872 = vmul.f32 1.0, %v871
      %v873 = vrcp.pop %v813
      %v874 = vmul.f32 1.0, %v873
      %v875 = vrcp.pop %v814
      %v876 = vmul.f32 1.0, %v875
      %v877 = vrcp.pop %v815
      %v878 = vmul.f32 1.0, %v877
      %v879 = vrcp.pop %v816
      %v880 = vmul.f32 1.0, %v879
      %v881 = vmul.f32 %v657, %v818
      %v882 = vmul.f32 %v658, %v820
      %v883 = vmul.f32 %v659, %v822
      %v884 = vmul.f32 %v660, %v824
      %v885 = vmul.f32 %v661, %v826
      %v886 = vmul.f32 %v662, %v828
      %v887 = vmul.f32 %v663, %v830
      %v888 = vmul.f32 %v664, %v832
      %v889 = vmul.f32 %v665, %v834
      %v890 = vmul.f32 %v666, %v836
      %v891 = vmul.f32 %v667, %v838
      %v892 = vmul.f32 %v668, %v840
      %v893 = vmul.f32 %v669, %v842
      %v894 = vmul.f32 %v670, %v844
      %v895 = vmul.f32 %v671, %v846
      %v896 = vmul.f32 %v672, %v848
      %v897 = vmul.f32 %v673, %v850
      %v898 = vmul.f32 %v674, %v852
      %v899 = vmul.f32 %v675, %v854
      %v900 = vmul.f32 %v676, %v856
      %v901 = vmul.f32 %v677, %v858
      %v902 = vmul.f32 %v678, %v860
      %v903 = vmul.f32 %v679, %v862
      %v904 = vmul.f32 %v680, %v864
      %v905 = vmul.f32 %v681, %v866
      %v906 = vmul.f32 %v682, %v868
      %v907 = vmul.f32 %v683, %v870
      %v908 = vmul.f32 %v684, %v872
      %v909 = vmul.f32 %v685, %v874
      %v910 = vmul.f32 %v686, %v876
      %v911 = vmul.f32 %v687, %v878
      %v912 = vmul.f32 %v688, %v880
      %v913 = vpack.c.bf16 %v882, %v881
      %v914 = vpack.c.bf16 %v884, %v883
      %v915 = vpack.c.bf16 %v886, %v885
      %v916 = vpack.c.bf16 %v888, %v887
      %v917 = vpack.c.bf16 %v890, %v889
      %v918 = vpack.c.bf16 %v892, %v891
      %v919 = vpack.c.bf16 %v894, %v893
      %v920 = vpack.c.bf16 %v896, %v895
      %v921 = vpack.c.bf16 %v898, %v897
      %v922 = vpack.c.bf16 %v900, %v899
      %v923 = vpack.c.bf16 %v902, %v901
      %v924 = vpack.c.bf16 %v904, %v903
      %v925 = vpack.c.bf16 %v906, %v905
      %v926 = vpack.c.bf16 %v908, %v907
      %v927 = vpack.c.bf16 %v910, %v909
      %v928 = vpack.c.bf16 %v912, %v911
      %v945 = vunpack.c.l.b16 %v913
      %v946 = vunpack.c.h.b16 %v913
      %v947 = vunpack.c.l.b16 %v914
      %v948 = vunpack.c.h.b16 %v914
      %v949 = vunpack.c.l.b16 %v915
      %v950 = vunpack.c.h.b16 %v915
      %v951 = vunpack.c.l.b16 %v916
      %v952 = vunpack.c.h.b16 %v916
      %v953 = vunpack.c.l.b16 %v917
      %v954 = vunpack.c.h.b16 %v917
      %v955 = vunpack.c.l.b16 %v918
      %v956 = vunpack.c.h.b16 %v918
      %v957 = vunpack.c.l.b16 %v919
      %v958 = vunpack.c.h.b16 %v919
      %v959 = vunpack.c.l.b16 %v920
      %v960 = vunpack.c.h.b16 %v920
      %v961 = vunpack.c.l.b16 %v921
      %v962 = vunpack.c.h.b16 %v921
      %v963 = vunpack.c.l.b16 %v922
      %v964 = vunpack.c.h.b16 %v922
      %v965 = vunpack.c.l.b16 %v923
      %v966 = vunpack.c.h.b16 %v923
      %v967 = vunpack.c.l.b16 %v924
      %v968 = vunpack.c.h.b16 %v924
      %v969 = vunpack.c.l.b16 %v925
      %v970 = vunpack.c.h.b16 %v925
      %v971 = vunpack.c.l.b16 %v926
      %v972 = vunpack.c.h.b16 %v926
      %v973 = vunpack.c.l.b16 %v927
      %v974 = vunpack.c.h.b16 %v927
      %v975 = vunpack.c.l.b16 %v928
      %v976 = vunpack.c.h.b16 %v928
      %v977 = vpack.c.b16 %v945, %v945
      %v978 = vpack.c.b16 %v946, %v946
      %v979 = vpack.c.b16 %v947, %v947
      %v980 = vpack.c.b16 %v948, %v948
      %v981 = vpack.c.b16 %v949, %v949
      %v982 = vpack.c.b16 %v950, %v950
      %v983 = vpack.c.b16 %v951, %v951
      %v984 = vpack.c.b16 %v952, %v952
      %v985 = vpack.c.b16 %v953, %v953
      %v986 = vpack.c.b16 %v954, %v954
      %v987 = vpack.c.b16 %v955, %v955
      %v988 = vpack.c.b16 %v956, %v956
      %v989 = vpack.c.b16 %v957, %v957
      %v990 = vpack.c.b16 %v958, %v958
      %v991 = vpack.c.b16 %v959, %v959
      %v992 = vpack.c.b16 %v960, %v960
      %v993 = vpack.c.b16 %v961, %v961
      %v994 = vpack.c.b16 %v962, %v962
      %v995 = vpack.c.b16 %v963, %v963
      %v996 = vpack.c.b16 %v964, %v964
      %v997 = vpack.c.b16 %v965, %v965
      %v998 = vpack.c.b16 %v966, %v966
      %v999 = vpack.c.b16 %v967, %v967
      %v1000 = vpack.c.b16 %v968, %v968
      %v1001 = vpack.c.b16 %v969, %v969
      %v1002 = vpack.c.b16 %v970, %v970
      %v1003 = vpack.c.b16 %v971, %v971
      %v1004 = vpack.c.b16 %v972, %v972
      %v1005 = vpack.c.b16 %v973, %v973
      %v1006 = vpack.c.b16 %v974, %v974
      %v1007 = vpack.c.b16 %v975, %v975
      %v1008 = vpack.c.b16 %v976, %v976
      %vm1041 = vcmask 388096
      %1042 = vst.msk [vmem:[%s264] sm:$0xf] %vm1041, %v977
      %1043 = vst.msk [vmem:[%s264 + $0x4] sm:$0xf] %vm1041, %v978
      %1044 = vst.msk [vmem:[%s264 + $0x8] sm:$0xf] %vm1041, %v979
      %1045 = vst.msk [vmem:[%s264 + $0xc] sm:$0xf] %vm1041, %v980
      %1046 = vst.msk [vmem:[%s264 + $0x10] sm:$0xf] %vm1041, %v981
      %1047 = vst.msk [vmem:[%s264 + $0x14] sm:$0xf] %vm1041, %v982
      %1048 = vst.msk [vmem:[%s264 + $0x18] sm:$0xf] %vm1041, %v983
      %1049 = vst.msk [vmem:[%s264 + $0x1c] sm:$0xf] %vm1041, %v984
      %1050 = vst.msk [vmem:[%s264 + $0x20] sm:$0xf] %vm1041, %v985
      %1051 = vst.msk [vmem:[%s264 + $0x24] sm:$0xf] %vm1041, %v986
      %1052 = vst.msk [vmem:[%s264 + $0x28] sm:$0xf] %vm1041, %v987
      %1053 = vst.msk [vmem:[%s264 + $0x2c] sm:$0xf] %vm1041, %v988
      %1054 = vst.msk [vmem:[%s264 + $0x30] sm:$0xf] %vm1041, %v989
      %1055 = vst.msk [vmem:[%s264 + $0x34] sm:$0xf] %vm1041, %v990
      %1056 = vst.msk [vmem:[%s264 + $0x38] sm:$0xf] %vm1041, %v991
      %1057 = vst.msk [vmem:[%s264 + $0x3c] sm:$0xf] %vm1041, %v992
      %1058 = vst.msk [vmem:[%s264 + $0x40] sm:$0xf] %vm1041, %v993
      %1059 = vst.msk [vmem:[%s264 + $0x44] sm:$0xf] %vm1041, %v994
      %1060 = vst.msk [vmem:[%s264 + $0x48] sm:$0xf] %vm1041, %v995
      %1061 = vst.msk [vmem:[%s264 + $0x4c] sm:$0xf] %vm1041, %v996
      %1062 = vst.msk [vmem:[%s264 + $0x50] sm:$0xf] %vm1041, %v997
      %1063 = vst.msk [vmem:[%s264 + $0x54] sm:$0xf] %vm1041, %v998
      %1064 = vst.msk [vmem:[%s264 + $0x58] sm:$0xf] %vm1041, %v999
      %1065 = vst.msk [vmem:[%s264 + $0x5c] sm:$0xf] %vm1041, %v1000
      %1066 = vst.msk [vmem:[%s264 + $0x60] sm:$0xf] %vm1041, %v1001
      %1067 = vst.msk [vmem:[%s264 + $0x64] sm:$0xf] %vm1041, %v1002
      %1068 = vst.msk [vmem:[%s264 + $0x68] sm:$0xf] %vm1041, %v1003
      %1069 = vst.msk [vmem:[%s264 + $0x6c] sm:$0xf] %vm1041, %v1004
      %1070 = vst.msk [vmem:[%s264 + $0x70] sm:$0xf] %vm1041, %v1005
      %1071 = vst.msk [vmem:[%s264 + $0x74] sm:$0xf] %vm1041, %v1006
      %1072 = vst.msk [vmem:[%s264 + $0x78] sm:$0xf] %vm1041, %v1007
      %1073 = vst.msk [vmem:[%s264 + $0x7c] sm:$0xf] %vm1041, %v1008
      %s1074 = smul.u32 32, %s19
      %p1075 = scmp.lt.s32.totalorder %s1074, 63
      %s1076 = scalar_select %p1075, %s1074, 63
      %p1077 = scmp.lt.s32.totalorder %s20, 0
      %s1078 = scalar_select %p1077, %s20, 0
      %s1079 = sadd.s32 %s1078, %s1076
      %s1080 = smul.addr %s1079, 4
      %s1081 = scalar_lea.vmem %s4, %s1080
      // Predicated region
      $region37: #{tpu_custom_call.1} parent=35 // pred_check
        %p1082 = pneg %p151
      $region38: #{tpu_custom_call.1} parent=35 // pred_check_branch
        %1084 = sbr.rel (%p1082) target = $region40
      $region39: #{tpu_custom_call.1} parent=35 // pred_region
        %s1085 = smul.u32 32, %s19
      $region40: #{tpu_custom_call.1} parent=35 // pred_fallthru
        _
    $region36: #{tpu_custom_call.1} parent=5 // pred_fallthru
      _
    %p1086 = scmp.le.s32.totalorder 2, %s10
    // Predicated region
    $region41: #{tpu_custom_call.1} parent=5 // pred_check
      %p1087 = pneg %p1086
    $region42: #{tpu_custom_call.1} parent=5 // pred_check_branch
      %1089 = sbr.rel (%p1087) target = $region44
    $region43: #{tpu_custom_call.1} parent=5 // pred_region
      %s1090 = ssub.s32 %s10, 2
      // Predicated region
      $region45: #{tpu_custom_call.1} parent=43 // pred_check
        %p1091 = pneg %p157
      $region46: #{tpu_custom_call.1} parent=43 // pred_check_branch
        %1093 = sbr.rel (%p1091) target = $region48
      $region47: #{tpu_custom_call.1} parent=43 // pred_region
        %s1094 = smul.u32 32, %s21
        %p1095 = scmp.lt.s32.totalorder %s1094, 63
        %s1096 = scalar_select %p1095, %s1094, 63
        %p1097 = scmp.lt.s32.totalorder %s22, 0
        %s1098 = scalar_select %p1097, %s22, 0
        %s1099 = sadd.s32 %s1098, %s1096
        %s1100 = smul.addr %s1099, 4
        %s1101 = scalar_lea.vmem %s4, %s1100
      $region48: #{tpu_custom_call.1} parent=43 // pred_fallthru
        _
    $region44: #{tpu_custom_call.1} parent=5 // pred_fallthru
      _
  $region6: #{tpu_custom_call.1} parent=0 // loop_footer
    %s14 = sadd.s32 1, %s10
  $region7: #{tpu_custom_call.1} parent=0 // loop_footer_branch
    %9 = sbr.rel target = $region3
  $region8: #{tpu_custom_call.1} parent=0 // loop_exit
    _

</llo_original>
